<compile_context>
chip_gen: v6e
topology: v6e:2x2x1
jax: 0.10.0
libtpu: 0.0.40
codegen_flags: <defaults>
</compile_context>

<pallas_src>
import functools

import jax
import jax.numpy as jnp
from jax.experimental import pallas as pl
from jax.experimental.pallas import tpu as pltpu

INPUT_SIZE = 4
HIDDEN_SIZE = 4
OUTPUT_SIZE = 2
LANES = 128


def _mlp_kernel(w1_ref, b1_ref, w2_ref, b2_ref, xT_ref, oT_ref):
    """One batch tile.

    xT_ref: (IN, tb, 128)  VMEM block -- sublane- and lane-dense per-feature slabs.
    oT_ref: (OUT, tb, 128) VMEM block -- unmasked full-vreg stores.
    w1/b1/w2/b2: tiny SMEM-resident parameter tables, read as scalars.
    """
    # One dense (tb, 128) slab per input feature, loaded once per tile.
    x = [xT_ref[k].astype(jnp.float32) for k in range(INPUT_SIZE)]

    # Layer 1 + ReLU: h[j] = relu(sum_k w1[k, j] * x[k] + b1[j])  -> 16 VPU FMAs.
    h = []
    for j in range(HIDDEN_SIZE):
        acc = x[0] * w1_ref[0, j]
        for k in range(1, INPUT_SIZE):
            acc = acc + x[k] * w1_ref[k, j]
        h.append(jnp.maximum(acc + b1_ref[j], 0.0))

    # Layer 2: y[m] = sum_j w2[j, m] * h[j] + b2[m]  -> 8 more FMAs.
    for m in range(OUTPUT_SIZE):
        acc = h[0] * w2_ref[0, m]
        for j in range(1, HIDDEN_SIZE):
            acc = acc + h[j] * w2_ref[j, m]
        oT_ref[m] = (acc + b2_ref[m]).astype(oT_ref.dtype)


def _cdiv(a, b):
    return -(-a // b)


def _round_up(x, m):
    return _cdiv(x, m) * m


def _pick_block_rows(nb, tb_target):
    """Number of 128-lane blocks per grid step.

    Keeps the block sublane-dense (multiple of 8, or the full dim for tiny
    problems) and, once the problem is big enough, guarantees >=2 grid steps so
    the "parallel" batch axis can shard across v7x's two TensorCores.
    """
    if nb <= 8:
        return nb                              # block == full dim (always legal)
    return min(tb_target, _round_up(_cdiv(nb, 2), 8))


def feed_forward_net_feature_major(xT, w1, b1, w2, b2, *, tb_target=1024):
    """Feature-major fast path: xT is (input_size, B); returns (output_size, B).

    No wrapper-side transposes -- only a metadata reshape and (if needed) a pad
    of the batch tail to the next multiple of 128.
    """
    in_dim, B = xT.shape
    assert in_dim == INPUT_SIZE
    dtype = xT.dtype

    nb = _cdiv(B, LANES)                       # number of 128-wide lane blocks
    Bp = nb * LANES
    if Bp != B:
        xT = jnp.pad(xT, ((0, 0), (0, Bp - B)))
    xT3 = xT.reshape(INPUT_SIZE, nb, LANES)    # free row-major metadata reshape

    tb = _pick_block_rows(nb, tb_target)       # ~tb*128 samples per grid step
    grid = (_cdiv(nb, tb),)                    # uneven tail blocks are masked

    smem = pl.BlockSpec(memory_space=pltpu.MemorySpace.SMEM)
    flops = 2 * Bp * (INPUT_SIZE * HIDDEN_SIZE + HIDDEN_SIZE * OUTPUT_SIZE)
    bytes_accessed = int(
        xT.dtype.itemsize * Bp * (INPUT_SIZE + OUTPUT_SIZE)
        + 4 * (INPUT_SIZE * HIDDEN_SIZE + HIDDEN_SIZE
               + HIDDEN_SIZE * OUTPUT_SIZE + OUTPUT_SIZE))

    yT3 = pl.pallas_call(
        _mlp_kernel,
        out_shape=jax.ShapeDtypeStruct((OUTPUT_SIZE, nb, LANES), dtype),
        grid=grid,
        in_specs=[
            smem,                                                  # w1 (IN, HID)
            smem,                                                  # b1 (HID,)
            smem,                                                  # w2 (HID, OUT)
            smem,                                                  # b2 (OUT,)
            pl.BlockSpec((INPUT_SIZE, tb, LANES), lambda i: (0, i, 0)),
        ],
        out_specs=pl.BlockSpec((OUTPUT_SIZE, tb, LANES), lambda i: (0, i, 0)),
        compiler_params=pltpu.CompilerParams(
            dimension_semantics=("parallel",)),
        cost_estimate=pl.CostEstimate(
            flops=flops, transcendentals=0, bytes_accessed=bytes_accessed),
    )(w1, b1, w2, b2, xT3)

    return yT3.reshape(OUTPUT_SIZE, Bp)[:, :B]


@functools.partial(jax.jit, static_argnames=("tb_target",))
def feed_forward_net(x, w1, b1, w2, b2, *, tb_target=1024):
    """PyTorch-contract wrapper: x (B, input_size) -> (B, output_size).

    The surrounding transposes each cost one extra HBM pass; prefer
    feed_forward_net_feature_major when producer/consumer can use
    feature-major activations.
    """
    yT = feed_forward_net_feature_major(x.T, w1, b1, w2, b2, tb_target=tb_target)
    return yT.T


def init_params(key, input_size, hidden_size, output_size, dtype=jnp.float32):
    """Deterministic init mimicking PyTorch nn.Linear default (U(+/- 1/sqrt(fan_in)))."""
    k1, k2, k3, k4 = jax.random.split(key, 4)
    lim1 = 1.0 / jnp.sqrt(jnp.array(input_size, dtype))
    lim2 = 1.0 / jnp.sqrt(jnp.array(hidden_size, dtype))
    w1 = jax.random.uniform(k1, (input_size, hidden_size), dtype, -lim1, lim1)
    b1 = jax.random.uniform(k2, (hidden_size,), dtype, -lim1, lim1)
    w2 = jax.random.uniform(k3, (hidden_size, output_size), dtype, -lim2, lim2)
    b2 = jax.random.uniform(k4, (output_size,), dtype, -lim2, lim2)
    return w1, b1, w2, b2


if __name__ == "__main__":
    key = jax.random.PRNGKey(0)
    kx, kp = jax.random.split(key)
    w1, b1, w2, b2 = init_params(kp, INPUT_SIZE, HIDDEN_SIZE, OUTPUT_SIZE)

    def ref_fwd(x):
        return jnp.maximum(x @ w1 + b1, 0.0) @ w2 + b2

    # Lane-aligned batch (multiple of 128) -- the intended fast path.
    x = jax.random.normal(kx, (256, INPUT_SIZE), jnp.float32)
    out = jax.block_until_ready(feed_forward_net(x, w1, b1, w2, b2))
    assert out.shape == (256, OUTPUT_SIZE)
    assert jnp.allclose(out, ref_fwd(x), atol=1e-5, rtol=1e-5)

    # Small ragged batch -- exercises the 128-pad tail path.
    x_small = jax.random.normal(kx, (8, INPUT_SIZE), jnp.float32)
    out_small = jax.block_until_ready(feed_forward_net(x_small, w1, b1, w2, b2))
    assert out_small.shape == (8, OUTPUT_SIZE)
    assert jnp.allclose(out_small, ref_fwd(x_small), atol=1e-5, rtol=1e-5)

    # Zero-transpose feature-major entry point.
    outT = jax.block_until_ready(
        jax.jit(feed_forward_net_feature_major)(x.T, w1, b1, w2, b2))
    assert outT.shape == (OUTPUT_SIZE, 256)
    assert jnp.allclose(outT.T, ref_fwd(x), atol=1e-5, rtol=1e-5)

    print("KERNEL_OK")
</pallas_src>

<mosaic_0001>
module attributes {stable_mosaic.version = 11 : i64} {
  func.func @_mlp_kernel(%arg0: i32, %arg1: memref<4x4xf32, #tpu.memory_space<smem>>, %arg2: memref<4xf32, #tpu.memory_space<smem>>, %arg3: memref<4x2xf32, #tpu.memory_space<smem>>, %arg4: memref<2xf32, #tpu.memory_space<smem>>, %arg5: memref<4x2x128xf32, #tpu.memory_space<vmem>>, %arg6: memref<2x2x128xf32, #tpu.memory_space<vmem>>) attributes {dimension_semantics = [#tpu.dimension_semantics<parallel>], iteration_bounds = array<i64: 1>, scalar_prefetch = 0 : i64, scratch_operands = 0 : i64, tpu.core_type = #tpu.core_type<tc>, window_params = [{transform_indices = @transform_0, window_bounds = array<i64: 4, 4>}, {transform_indices = @transform_1, window_bounds = array<i64: 4>}, {transform_indices = @transform_2, window_bounds = array<i64: 4, 2>}, {transform_indices = @transform_3, window_bounds = array<i64: 2>}, {transform_indices = @transform_4, window_bounds = array<i64: 4, 2, 128>}, {transform_indices = @transform_5, window_bounds = array<i64: 2, 2, 128>}]} {
    %c0 = arith.constant 0 : index
    %c0_0 = arith.constant 0 : index
    %c0_1 = arith.constant 0 : index
    %0 = vector.load %arg5[%c0, %c0_0, %c0_1] : memref<4x2x128xf32, #tpu.memory_space<vmem>>, vector<1x2x128xf32>
    %1 = vector.shape_cast %0 : vector<1x2x128xf32> to vector<2x128xf32>
    %c1 = arith.constant 1 : index
    %c0_2 = arith.constant 0 : index
    %c0_3 = arith.constant 0 : index
    %2 = vector.load %arg5[%c1, %c0_2, %c0_3] : memref<4x2x128xf32, #tpu.memory_space<vmem>>, vector<1x2x128xf32>
    %3 = vector.shape_cast %2 : vector<1x2x128xf32> to vector<2x128xf32>
    %c2 = arith.constant 2 : index
    %c0_4 = arith.constant 0 : index
    %c0_5 = arith.constant 0 : index
    %4 = vector.load %arg5[%c2, %c0_4, %c0_5] : memref<4x2x128xf32, #tpu.memory_space<vmem>>, vector<1x2x128xf32>
    %5 = vector.shape_cast %4 : vector<1x2x128xf32> to vector<2x128xf32>
    %c3 = arith.constant 3 : index
    %c0_6 = arith.constant 0 : index
    %c0_7 = arith.constant 0 : index
    %6 = vector.load %arg5[%c3, %c0_6, %c0_7] : memref<4x2x128xf32, #tpu.memory_space<vmem>>, vector<1x2x128xf32>
    %7 = vector.shape_cast %6 : vector<1x2x128xf32> to vector<2x128xf32>
    %c0_8 = arith.constant 0 : index
    %c0_9 = arith.constant 0 : index
    %8 = memref.load %arg1[%c0_8, %c0_9] : memref<4x4xf32, #tpu.memory_space<smem>>
    %9 = vector.broadcast %8 : f32 to vector<2x128xf32>
    %10 = arith.mulf %1, %9 : vector<2x128xf32>
    %c1_10 = arith.constant 1 : index
    %c0_11 = arith.constant 0 : index
    %11 = memref.load %arg1[%c1_10, %c0_11] : memref<4x4xf32, #tpu.memory_space<smem>>
    %12 = vector.broadcast %11 : f32 to vector<2x128xf32>
    %13 = arith.mulf %3, %12 : vector<2x128xf32>
    %14 = arith.addf %10, %13 : vector<2x128xf32>
    %c2_12 = arith.constant 2 : index
    %c0_13 = arith.constant 0 : index
    %15 = memref.load %arg1[%c2_12, %c0_13] : memref<4x4xf32, #tpu.memory_space<smem>>
    %16 = vector.broadcast %15 : f32 to vector<2x128xf32>
    %17 = arith.mulf %5, %16 : vector<2x128xf32>
    %18 = arith.addf %14, %17 : vector<2x128xf32>
    %c3_14 = arith.constant 3 : index
    %c0_15 = arith.constant 0 : index
    %19 = memref.load %arg1[%c3_14, %c0_15] : memref<4x4xf32, #tpu.memory_space<smem>>
    %20 = vector.broadcast %19 : f32 to vector<2x128xf32>
    %21 = arith.mulf %7, %20 : vector<2x128xf32>
    %22 = arith.addf %18, %21 : vector<2x128xf32>
    %c0_16 = arith.constant 0 : index
    %23 = memref.load %arg2[%c0_16] : memref<4xf32, #tpu.memory_space<smem>>
    %24 = vector.broadcast %23 : f32 to vector<2x128xf32>
    %25 = arith.addf %22, %24 : vector<2x128xf32>
    %cst = arith.constant 0.000000e+00 : f32
    %26 = vector.broadcast %cst : f32 to vector<2x128xf32>
    %27 = arith.maximumf %25, %26 : vector<2x128xf32>
    %c0_17 = arith.constant 0 : index
    %c1_18 = arith.constant 1 : index
    %28 = memref.load %arg1[%c0_17, %c1_18] : memref<4x4xf32, #tpu.memory_space<smem>>
    %29 = vector.broadcast %28 : f32 to vector<2x128xf32>
    %30 = arith.mulf %1, %29 : vector<2x128xf32>
    %c1_19 = arith.constant 1 : index
    %c1_20 = arith.constant 1 : index
    %31 = memref.load %arg1[%c1_19, %c1_20] : memref<4x4xf32, #tpu.memory_space<smem>>
    %32 = vector.broadcast %31 : f32 to vector<2x128xf32>
    %33 = arith.mulf %3, %32 : vector<2x128xf32>
    %34 = arith.addf %30, %33 : vector<2x128xf32>
    %c2_21 = arith.constant 2 : index
    %c1_22 = arith.constant 1 : index
    %35 = memref.load %arg1[%c2_21, %c1_22] : memref<4x4xf32, #tpu.memory_space<smem>>
    %36 = vector.broadcast %35 : f32 to vector<2x128xf32>
    %37 = arith.mulf %5, %36 : vector<2x128xf32>
    %38 = arith.addf %34, %37 : vector<2x128xf32>
    %c3_23 = arith.constant 3 : index
    %c1_24 = arith.constant 1 : index
    %39 = memref.load %arg1[%c3_23, %c1_24] : memref<4x4xf32, #tpu.memory_space<smem>>
    %40 = vector.broadcast %39 : f32 to vector<2x128xf32>
    %41 = arith.mulf %7, %40 : vector<2x128xf32>
    %42 = arith.addf %38, %41 : vector<2x128xf32>
    %c1_25 = arith.constant 1 : index
    %43 = memref.load %arg2[%c1_25] : memref<4xf32, #tpu.memory_space<smem>>
    %44 = vector.broadcast %43 : f32 to vector<2x128xf32>
    %45 = arith.addf %42, %44 : vector<2x128xf32>
    %cst_26 = arith.constant 0.000000e+00 : f32
    %46 = vector.broadcast %cst_26 : f32 to vector<2x128xf32>
    %47 = arith.maximumf %45, %46 : vector<2x128xf32>
    %c0_27 = arith.constant 0 : index
    %c2_28 = arith.constant 2 : index
    %48 = memref.load %arg1[%c0_27, %c2_28] : memref<4x4xf32, #tpu.memory_space<smem>>
    %49 = vector.broadcast %48 : f32 to vector<2x128xf32>
    %50 = arith.mulf %1, %49 : vector<2x128xf32>
    %c1_29 = arith.constant 1 : index
    %c2_30 = arith.constant 2 : index
    %51 = memref.load %arg1[%c1_29, %c2_30] : memref<4x4xf32, #tpu.memory_space<smem>>
    %52 = vector.broadcast %51 : f32 to vector<2x128xf32>
    %53 = arith.mulf %3, %52 : vector<2x128xf32>
    %54 = arith.addf %50, %53 : vector<2x128xf32>
    %c2_31 = arith.constant 2 : index
    %c2_32 = arith.constant 2 : index
    %55 = memref.load %arg1[%c2_31, %c2_32] : memref<4x4xf32, #tpu.memory_space<smem>>
    %56 = vector.broadcast %55 : f32 to vector<2x128xf32>
    %57 = arith.mulf %5, %56 : vector<2x128xf32>
    %58 = arith.addf %54, %57 : vector<2x128xf32>
    %c3_33 = arith.constant 3 : index
    %c2_34 = arith.constant 2 : index
    %59 = memref.load %arg1[%c3_33, %c2_34] : memref<4x4xf32, #tpu.memory_space<smem>>
    %60 = vector.broadcast %59 : f32 to vector<2x128xf32>
    %61 = arith.mulf %7, %60 : vector<2x128xf32>
    %62 = arith.addf %58, %61 : vector<2x128xf32>
    %c2_35 = arith.constant 2 : index
    %63 = memref.load %arg2[%c2_35] : memref<4xf32, #tpu.memory_space<smem>>
    %64 = vector.broadcast %63 : f32 to vector<2x128xf32>
    %65 = arith.addf %62, %64 : vector<2x128xf32>
    %cst_36 = arith.constant 0.000000e+00 : f32
    %66 = vector.broadcast %cst_36 : f32 to vector<2x128xf32>
    %67 = arith.maximumf %65, %66 : vector<2x128xf32>
    %c0_37 = arith.constant 0 : index
    %c3_38 = arith.constant 3 : index
    %68 = memref.load %arg1[%c0_37, %c3_38] : memref<4x4xf32, #tpu.memory_space<smem>>
    %69 = vector.broadcast %68 : f32 to vector<2x128xf32>
    %70 = arith.mulf %1, %69 : vector<2x128xf32>
    %c1_39 = arith.constant 1 : index
    %c3_40 = arith.constant 3 : index
    %71 = memref.load %arg1[%c1_39, %c3_40] : memref<4x4xf32, #tpu.memory_space<smem>>
    %72 = vector.broadcast %71 : f32 to vector<2x128xf32>
    %73 = arith.mulf %3, %72 : vector<2x128xf32>
    %74 = arith.addf %70, %73 : vector<2x128xf32>
    %c2_41 = arith.constant 2 : index
    %c3_42 = arith.constant 3 : index
    %75 = memref.load %arg1[%c2_41, %c3_42] : memref<4x4xf32, #tpu.memory_space<smem>>
    %76 = vector.broadcast %75 : f32 to vector<2x128xf32>
    %77 = arith.mulf %5, %76 : vector<2x128xf32>
    %78 = arith.addf %74, %77 : vector<2x128xf32>
    %c3_43 = arith.constant 3 : index
    %c3_44 = arith.constant 3 : index
    %79 = memref.load %arg1[%c3_43, %c3_44] : memref<4x4xf32, #tpu.memory_space<smem>>
    %80 = vector.broadcast %79 : f32 to vector<2x128xf32>
    %81 = arith.mulf %7, %80 : vector<2x128xf32>
    %82 = arith.addf %78, %81 : vector<2x128xf32>
    %c3_45 = arith.constant 3 : index
    %83 = memref.load %arg2[%c3_45] : memref<4xf32, #tpu.memory_space<smem>>
    %84 = vector.broadcast %83 : f32 to vector<2x128xf32>
    %85 = arith.addf %82, %84 : vector<2x128xf32>
    %cst_46 = arith.constant 0.000000e+00 : f32
    %86 = vector.broadcast %cst_46 : f32 to vector<2x128xf32>
    %87 = arith.maximumf %85, %86 : vector<2x128xf32>
    %c0_47 = arith.constant 0 : index
    %c0_48 = arith.constant 0 : index
    %88 = memref.load %arg3[%c0_47, %c0_48] : memref<4x2xf32, #tpu.memory_space<smem>>
    %89 = vector.broadcast %88 : f32 to vector<2x128xf32>
    %90 = arith.mulf %27, %89 : vector<2x128xf32>
    %c1_49 = arith.constant 1 : index
    %c0_50 = arith.constant 0 : index
    %91 = memref.load %arg3[%c1_49, %c0_50] : memref<4x2xf32, #tpu.memory_space<smem>>
    %92 = vector.broadcast %91 : f32 to vector<2x128xf32>
    %93 = arith.mulf %47, %92 : vector<2x128xf32>
    %94 = arith.addf %90, %93 : vector<2x128xf32>
    %c2_51 = arith.constant 2 : index
    %c0_52 = arith.constant 0 : index
    %95 = memref.load %arg3[%c2_51, %c0_52] : memref<4x2xf32, #tpu.memory_space<smem>>
    %96 = vector.broadcast %95 : f32 to vector<2x128xf32>
    %97 = arith.mulf %67, %96 : vector<2x128xf32>
    %98 = arith.addf %94, %97 : vector<2x128xf32>
    %c3_53 = arith.constant 3 : index
    %c0_54 = arith.constant 0 : index
    %99 = memref.load %arg3[%c3_53, %c0_54] : memref<4x2xf32, #tpu.memory_space<smem>>
    %100 = vector.broadcast %99 : f32 to vector<2x128xf32>
    %101 = arith.mulf %87, %100 : vector<2x128xf32>
    %102 = arith.addf %98, %101 : vector<2x128xf32>
    %c0_55 = arith.constant 0 : index
    %103 = memref.load %arg4[%c0_55] : memref<2xf32, #tpu.memory_space<smem>>
    %104 = vector.broadcast %103 : f32 to vector<2x128xf32>
    %105 = arith.addf %102, %104 : vector<2x128xf32>
    %c0_56 = arith.constant 0 : index
    %c0_57 = arith.constant 0 : index
    %c0_58 = arith.constant 0 : index
    %106 = vector.load %arg6[%c0_56, %c0_57, %c0_58] : memref<2x2x128xf32, #tpu.memory_space<vmem>>, vector<1x2x128xf32>
    %107 = vector.shape_cast %106 : vector<1x2x128xf32> to vector<2x128xf32>
    %108 = vector.shape_cast %105 : vector<2x128xf32> to vector<1x2x128xf32>
    tpu.vector_store %arg6[%c0_56, %c0_57, %c0_58], %108 {strides = array<i32>} : memref<2x2x128xf32, #tpu.memory_space<vmem>>, vector<1x2x128xf32>,
    %c0_59 = arith.constant 0 : index
    %c1_60 = arith.constant 1 : index
    %109 = memref.load %arg3[%c0_59, %c1_60] : memref<4x2xf32, #tpu.memory_space<smem>>
    %110 = vector.broadcast %109 : f32 to vector<2x128xf32>
    %111 = arith.mulf %27, %110 : vector<2x128xf32>
    %c1_61 = arith.constant 1 : index
    %c1_62 = arith.constant 1 : index
    %112 = memref.load %arg3[%c1_61, %c1_62] : memref<4x2xf32, #tpu.memory_space<smem>>
    %113 = vector.broadcast %112 : f32 to vector<2x128xf32>
    %114 = arith.mulf %47, %113 : vector<2x128xf32>
    %115 = arith.addf %111, %114 : vector<2x128xf32>
    %c2_63 = arith.constant 2 : index
    %c1_64 = arith.constant 1 : index
    %116 = memref.load %arg3[%c2_63, %c1_64] : memref<4x2xf32, #tpu.memory_space<smem>>
    %117 = vector.broadcast %116 : f32 to vector<2x128xf32>
    %118 = arith.mulf %67, %117 : vector<2x128xf32>
    %119 = arith.addf %115, %118 : vector<2x128xf32>
    %c3_65 = arith.constant 3 : index
    %c1_66 = arith.constant 1 : index
    %120 = memref.load %arg3[%c3_65, %c1_66] : memref<4x2xf32, #tpu.memory_space<smem>>
    %121 = vector.broadcast %120 : f32 to vector<2x128xf32>
    %122 = arith.mulf %87, %121 : vector<2x128xf32>
    %123 = arith.addf %119, %122 : vector<2x128xf32>
    %c1_67 = arith.constant 1 : index
    %124 = memref.load %arg4[%c1_67] : memref<2xf32, #tpu.memory_space<smem>>
    %125 = vector.broadcast %124 : f32 to vector<2x128xf32>
    %126 = arith.addf %123, %125 : vector<2x128xf32>
    %c1_68 = arith.constant 1 : index
    %c0_69 = arith.constant 0 : index
    %c0_70 = arith.constant 0 : index
    %127 = vector.load %arg6[%c1_68, %c0_69, %c0_70] : memref<2x2x128xf32, #tpu.memory_space<vmem>>, vector<1x2x128xf32>
    %128 = vector.shape_cast %127 : vector<1x2x128xf32> to vector<2x128xf32>
    %129 = vector.shape_cast %126 : vector<2x128xf32> to vector<1x2x128xf32>
    tpu.vector_store %arg6[%c1_68, %c0_69, %c0_70], %129 {strides = array<i32>} : memref<2x2x128xf32, #tpu.memory_space<vmem>>, vector<1x2x128xf32>,
    return
  }
  func.func @transform_0(%arg0: i32) -> (i32, i32) {
    %c0_i32 = arith.constant 0 : i32
    %c0_i32_0 = arith.constant 0 : i32
    %c0_i32_1 = arith.constant 0 : i32
    return %c0_i32, %c0_i32_0 : i32, i32
  }
  func.func @transform_1(%arg0: i32) -> i32 {
    %c0_i32 = arith.constant 0 : i32
    %c0_i32_0 = arith.constant 0 : i32
    return %c0_i32 : i32
  }
  func.func @transform_2(%arg0: i32) -> (i32, i32) {
    %c0_i32 = arith.constant 0 : i32
    %c0_i32_0 = arith.constant 0 : i32
    %c0_i32_1 = arith.constant 0 : i32
    return %c0_i32, %c0_i32_0 : i32, i32
  }
  func.func @transform_3(%arg0: i32) -> i32 {
    %c0_i32 = arith.constant 0 : i32
    %c0_i32_0 = arith.constant 0 : i32
    return %c0_i32 : i32
  }
  func.func @transform_4(%arg0: i32) -> (i32, i32, i32) {
    %c0_i32 = arith.constant 0 : i32
    %c0_i32_0 = arith.constant 0 : i32
    %c0_i32_1 = arith.constant 0 : i32
    return %c0_i32, %arg0, %c0_i32_0 : i32, i32, i32
  }
  func.func @transform_5(%arg0: i32) -> (i32, i32, i32) {
    %c0_i32 = arith.constant 0 : i32
    %c0_i32_0 = arith.constant 0 : i32
    %c0_i32_1 = arith.constant 0 : i32
    return %c0_i32, %arg0, %c0_i32_0 : i32, i32, i32
  }
}

</mosaic_0001>

<llo_original>
// kernel: feed_forward_net.1
$region0: #{feed_forward_net.1}
  #allocation0 [shape = 'u32[]', space=smem, size = 0x4, offset = 0x4, fixed_abs, tag = 'smem constant byte address 0x4 - core index']
  #allocation1 [shape = 'u32[144,128]{1,0:T(1,128)}', space=vmem, size = 0x12000, scoped, tag = 'internal scratch']
  %s0 = inlined_call_operand.vmem [shape: f32[4,4], index: 0, kind: input, shape index: {}]
  %s1 = inlined_call_operand.vmem [shape: f32[4], index: 1, kind: input, shape index: {}]
  %s2 = inlined_call_operand.vmem [shape: f32[4,2], index: 2, kind: input, shape index: {}]
  %s3 = inlined_call_operand.vmem [shape: f32[2], index: 3, kind: input, shape index: {}]
  %s4 = inlined_call_operand.vmem [shape: f32[4,2,128], index: 4, kind: input, shape index: {}]
  %s5 = inlined_call_operand.vmem [shape: f32[2,2,128], index: 5, kind: output, shape index: {}]
  %s6 = sld [smem:[#allocation0]]
  $region46: #{feed_forward_net.1} parent=0
    _
  %s8 = ssub.s32 1, %s6
  %s9 = scalar_select 0, %s8, %s6
  $region1: #{feed_forward_net.1} parent=0
    #allocation2 [shape = 'u8[2048]{0}', space=smem, size = 0x800, scoped, tag = 'input window, operand 0, single buffered']
    #allocation3 [shape = 's32[1]{0}', space=sflag, size = 0x4, scoped, tag = 'scoped memory for feed_forward_net.1']
    #allocation4 [shape = 'u8[512]{0}', space=smem, size = 0x200, scoped, tag = 'input window, operand 1, single buffered']
    #allocation5 [shape = 's32[1]{0}', space=sflag, size = 0x4, scoped, tag = 'scoped memory for feed_forward_net.1']
    #allocation6 [shape = 'u8[2048]{0}', space=smem, size = 0x800, scoped, tag = 'input window, operand 2, single buffered']
    #allocation7 [shape = 'u8[512]{0}', space=smem, size = 0x200, scoped, tag = 'input window, operand 3, single buffered']
    #allocation8 [shape = 's32[1]{0}', space=sflag, size = 0x4, scoped, tag = 'scoped memory for feed_forward_net.1']
    %10 = vsyncpa [#allocation3], 0
    %11 = vsyncpa [#allocation5], 0
    %12 = vsyncpa [#allocation8], 0
    // Predicated region
    $region2: #{feed_forward_net.1} parent=1 // pred_check
      _
    $region3: #{feed_forward_net.1} parent=1 // pred_check_branch
      %14 = sbr.rel (0) target = $region5
    $region4: #{feed_forward_net.1} parent=1 // pred_region
      %s16 = ssub.s32 64, 64
      %17 = vsyncadd [#allocation3], %s16
      %s19 = sshll.u32 %s0, 4
      %s20 = int_to_ptr.vmem [resolvable:$true] %s19
      %22 = dma.vmem_to_smem %s20, 64, [#allocation2], [#allocation3]
    $region5: #{feed_forward_net.1} parent=1 // pred_fallthru
      _
    // Predicated region
    $region6: #{feed_forward_net.1} parent=1 // pred_check
      _
    $region7: #{feed_forward_net.1} parent=1 // pred_check_branch
      %24 = sbr.rel (0) target = $region9
    $region8: #{feed_forward_net.1} parent=1 // pred_region
      %s26 = ssub.s32 16, 16
      %27 = vsyncadd [#allocation5], %s26
      %s29 = sshll.u32 %s1, 4
      %s30 = int_to_ptr.vmem [resolvable:$true] %s29
      %32 = dma.vmem_to_smem %s30, 16, [#allocation4], [#allocation5]
    $region9: #{feed_forward_net.1} parent=1 // pred_fallthru
      _
    // Predicated region
    $region10: #{feed_forward_net.1} parent=1 // pred_check
      _
    $region11: #{feed_forward_net.1} parent=1 // pred_check_branch
      %34 = sbr.rel (0) target = $region13
    $region12: #{feed_forward_net.1} parent=1 // pred_region
      %s36 = ssub.s32 64, 64
      %37 = vsyncadd [#allocation5], %s36
      %s39 = sshll.u32 %s2, 4
      %s40 = int_to_ptr.vmem [resolvable:$true] %s39
      %42 = dma.vmem_to_smem %s40, 64, [#allocation6], [#allocation5]
    $region13: #{feed_forward_net.1} parent=1 // pred_fallthru
      _
    // Predicated region
    $region14: #{feed_forward_net.1} parent=1 // pred_check
      _
    $region15: #{feed_forward_net.1} parent=1 // pred_check_branch
      %44 = sbr.rel (0) target = $region17
    $region16: #{feed_forward_net.1} parent=1 // pred_region
      %s46 = ssub.s32 16, 16
      %47 = vsyncadd [#allocation8], %s46
      %s49 = sshll.u32 %s3, 4
      %s50 = int_to_ptr.vmem [resolvable:$true] %s49
      %52 = dma.vmem_to_smem %s50, 16, [#allocation7], [#allocation8]
    $region17: #{feed_forward_net.1} parent=1 // pred_fallthru
      _
    // Predicated region
    $region18: #{feed_forward_net.1} parent=1 // pred_check
      _
    $region19: #{feed_forward_net.1} parent=1 // pred_check_branch
      %54 = sbr.rel (0) target = $region21
    $region20: #{feed_forward_net.1} parent=1 // pred_region
      _
    $region21: #{feed_forward_net.1} parent=1 // pred_fallthru
      _
    // Predicated region
    $region22: #{feed_forward_net.1} parent=1 // pred_check
      _
    $region23: #{feed_forward_net.1} parent=1 // pred_check_branch
      %56 = sbr.rel (0) target = $region25
    $region24: #{feed_forward_net.1} parent=1 // pred_region
      %57 = dma.done [#allocation3], 64
    $region25: #{feed_forward_net.1} parent=1 // pred_fallthru
      _
    // Predicated region
    $region26: #{feed_forward_net.1} parent=1 // pred_check
      _
    $region27: #{feed_forward_net.1} parent=1 // pred_check_branch
      %59 = sbr.rel (0) target = $region29
    $region28: #{feed_forward_net.1} parent=1 // pred_region
      %60 = dma.done [#allocation5], 16
    $region29: #{feed_forward_net.1} parent=1 // pred_fallthru
      _
    // Predicated region
    $region30: #{feed_forward_net.1} parent=1 // pred_check
      _
    $region31: #{feed_forward_net.1} parent=1 // pred_check_branch
      %62 = sbr.rel (0) target = $region33
    $region32: #{feed_forward_net.1} parent=1 // pred_region
      %63 = dma.done [#allocation5], 64
    $region33: #{feed_forward_net.1} parent=1 // pred_fallthru
      _
    // Predicated region
    $region34: #{feed_forward_net.1} parent=1 // pred_check
      _
    $region35: #{feed_forward_net.1} parent=1 // pred_check_branch
      %65 = sbr.rel (0) target = $region37
    $region36: #{feed_forward_net.1} parent=1 // pred_region
      %66 = dma.done [#allocation8], 16
    $region37: #{feed_forward_net.1} parent=1 // pred_fallthru
      _
    %67 = sfence
    %v68 = vld [vmem:[%s4] sm:$0x3]
    %s69 = scalar_lea.vmem %s4, 2
    %v70 = vld [vmem:[%s69] sm:$0x3]
    %s71 = scalar_lea.vmem %s4, 4
    %v72 = vld [vmem:[%s71] sm:$0x3]
    %s73 = scalar_lea.vmem %s4, 6
    %v74 = vld [vmem:[%s73] sm:$0x3]
    %s75 = sld [smem:[#allocation2]]
    %v76 = vstv %s75
    %v77 = vmul.f32 %v68, %v76
    %s78 = sld [smem:[#allocation2 + $0x80]]
    %v79 = vstv %s78
    %v80 = vmul.f32 %v70, %v79
    %v81 = vadd.f32 %v77, %v80
    %s82 = sld [smem:[#allocation2 + $0x100]]
    %v83 = vstv %s82
    %v84 = vmul.f32 %v72, %v83
    %v85 = vadd.f32 %v81, %v84
    %s86 = sld [smem:[#allocation2 + $0x180]]
    %v87 = vstv %s86
    %v88 = vmul.f32 %v74, %v87
    %v89 = vadd.f32 %v85, %v88
    %s90 = sld [smem:[#allocation4]]
    %v91 = vstv %s90
    %v92 = vadd.f32 %v89, %v91
    %v93 = vmax.f32 %v92, 0.0
    %s94 = sld [smem:[#allocation2 + $0x1]]
    %v95 = vstv %s94
    %v96 = vmul.f32 %v68, %v95
    %s97 = sld [smem:[#allocation2 + $0x81]]
    %v98 = vstv %s97
    %v99 = vmul.f32 %v70, %v98
    %v100 = vadd.f32 %v96, %v99
    %s101 = sld [smem:[#allocation2 + $0x101]]
    %v102 = vstv %s101
    %v103 = vmul.f32 %v72, %v102
    %v104 = vadd.f32 %v100, %v103
    %s105 = sld [smem:[#allocation2 + $0x181]]
    %v106 = vstv %s105
    %v107 = vmul.f32 %v74, %v106
    %v108 = vadd.f32 %v104, %v107
    %s109 = sld [smem:[#allocation4 + $0x1]]
    %v110 = vstv %s109
    %v111 = vadd.f32 %v108, %v110
    %v112 = vmax.f32 %v111, 0.0
    %s113 = sld [smem:[#allocation2 + $0x2]]
    %v114 = vstv %s113
    %v115 = vmul.f32 %v68, %v114
    %s116 = sld [smem:[#allocation2 + $0x82]]
    %v117 = vstv %s116
    %v118 = vmul.f32 %v70, %v117
    %v119 = vadd.f32 %v115, %v118
    %s120 = sld [smem:[#allocation2 + $0x102]]
    %v121 = vstv %s120
    %v122 = vmul.f32 %v72, %v121
    %v123 = vadd.f32 %v119, %v122
    %s124 = sld [smem:[#allocation2 + $0x182]]
    %v125 = vstv %s124
    %v126 = vmul.f32 %v74, %v125
    %v127 = vadd.f32 %v123, %v126
    %s128 = sld [smem:[#allocation4 + $0x2]]
    %v129 = vstv %s128
    %v130 = vadd.f32 %v127, %v129
    %v131 = vmax.f32 %v130, 0.0
    %s132 = sld [smem:[#allocation2 + $0x3]]
    %v133 = vstv %s132
    %v134 = vmul.f32 %v68, %v133
    %s135 = sld [smem:[#allocation2 + $0x83]]
    %v136 = vstv %s135
    %v137 = vmul.f32 %v70, %v136
    %v138 = vadd.f32 %v134, %v137
    %s139 = sld [smem:[#allocation2 + $0x103]]
    %v140 = vstv %s139
    %v141 = vmul.f32 %v72, %v140
    %v142 = vadd.f32 %v138, %v141
    %s143 = sld [smem:[#allocation2 + $0x183]]
    %v144 = vstv %s143
    %v145 = vmul.f32 %v74, %v144
    %v146 = vadd.f32 %v142, %v145
    %s147 = sld [smem:[#allocation4 + $0x3]]
    %v148 = vstv %s147
    %v149 = vadd.f32 %v146, %v148
    %v150 = vmax.f32 %v149, 0.0
    %s151 = sld [smem:[#allocation6]]
    %v152 = vstv %s151
    %v153 = vmul.f32 %v93, %v152
    %s154 = sld [smem:[#allocation6 + $0x80]]
    %v155 = vstv %s154
    %v156 = vmul.f32 %v112, %v155
    %v157 = vadd.f32 %v153, %v156
    %s158 = sld [smem:[#allocation6 + $0x100]]
    %v159 = vstv %s158
    %v160 = vmul.f32 %v131, %v159
    %v161 = vadd.f32 %v157, %v160
    %s162 = sld [smem:[#allocation6 + $0x180]]
    %v163 = vstv %s162
    %v164 = vmul.f32 %v150, %v163
    %v165 = vadd.f32 %v161, %v164
    %s166 = sld [smem:[#allocation7]]
    %v167 = vstv %s166
    %v168 = vadd.f32 %v165, %v167
    %169 = vst [vmem:[%s5] sm:$0x3] %v168
    %s170 = sld [smem:[#allocation6 + $0x1]]
    %v171 = vstv %s170
    %v172 = vmul.f32 %v93, %v171
    %s173 = sld [smem:[#allocation6 + $0x81]]
    %v174 = vstv %s173
    %v175 = vmul.f32 %v112, %v174
    %v176 = vadd.f32 %v172, %v175
    %s177 = sld [smem:[#allocation6 + $0x101]]
    %v178 = vstv %s177
    %v179 = vmul.f32 %v131, %v178
    %v180 = vadd.f32 %v176, %v179
    %s181 = sld [smem:[#allocation6 + $0x181]]
    %v182 = vstv %s181
    %v183 = vmul.f32 %v150, %v182
    %v184 = vadd.f32 %v180, %v183
    %s185 = sld [smem:[#allocation7 + $0x1]]
    %v186 = vstv %s185
    %v187 = vadd.f32 %v184, %v186
    %s188 = scalar_lea.vmem %s5, 2
    %189 = vst [vmem:[%s188] sm:$0x3] %v187
    // Predicated region
    $region38: #{feed_forward_net.1} parent=1 // pred_check
      _
    $region39: #{feed_forward_net.1} parent=1 // pred_check_branch
      %191 = sbr.rel (0) target = $region41
    $region40: #{feed_forward_net.1} parent=1 // pred_region
      _
    $region41: #{feed_forward_net.1} parent=1 // pred_fallthru
      _
    // Predicated region
    $region42: #{feed_forward_net.1} parent=1 // pred_check
      _
    $region43: #{feed_forward_net.1} parent=1 // pred_check_branch
      %193 = sbr.rel (0) target = $region45
    $region44: #{feed_forward_net.1} parent=1 // pred_region
      _
    $region45: #{feed_forward_net.1} parent=1 // pred_fallthru
      _
    %194 = vsyncpa [#allocation3], 1
    %195 = vsyncpa [#allocation5], 1
    %196 = vsyncpa [#allocation8], 1

</llo_original>
